<compile_context>
chip_gen: v5e
topology: v5e:2x2
jax: 0.10.0
libtpu: 0.0.40
codegen_flags: <defaults>
</compile_context>

<pallas_src>
import functools

import jax
import jax.numpy as jnp
from jax.experimental import pallas as pl
from jax.experimental.pallas import tpu as pltpu

_LANE = 128
_SUBLANE = 8

_FNAMES = ("fr", "fr6", "fs", "fe", "fg", "fx", "f3")
# Only these branches need f32 math (tanh / exp / reciprocal); the rest run
# in the input dtype (bf16 VPU on v6e/v7x stays packed).
_NEEDS_F32 = frozenset({"fs", "fe", "fg"})

_FLOPS_PER_ELEM = {"fx": 0, "fr": 1, "fr6": 2, "fs": 3, "fe": 3, "fg": 3, "f3": 4}
_TRANS_PER_ELEM = {"fs": 1, "fe": 1, "fg": 1}


def _round_up(a, m):
    return ((a + m - 1) // m) * m


@functools.lru_cache(maxsize=1)
def _device_params():
    """Per-TPU-generation (target_block_bytes, split_for_two_cores, vmem_limit)."""
    kind = ""
    try:
        kind = jax.devices()[0].device_kind.lower()
    except Exception:
        pass
    if "v7" in kind or "7x" in kind:
        # v7x: ~3.2 TB/s per TC -> 8 MiB blocks so the ~0.35us/step overhead
        # is <10% of a step.  4x block (double-buffered in+out) = 32 MiB, so
        # raise the scoped VMEM limit (48 MiB << 64 MiB physical).  Two TCs
        # -> make sure the grid has >=2 "parallel" steps when there is work.
        return 8 * 1024 * 1024, True, 48 * 1024 * 1024
    if "v6" in kind:
        # v6e: ~1.4 TB/s, 1 TC.  4 MiB blocks; 4x block = 16 MiB fits the
        # 32 MiB default scoped VMEM without touching vmem_limit_bytes.
        return 4 * 1024 * 1024, False, None
    # v5e (and unknown chips): 2 MiB blocks already hide the per-step overhead
    # at ~0.82 TB/s, and 4x block = 8 MiB stays under the 16 MiB scoped default.
    return 2 * 1024 * 1024, False, None


def _activation(fname, x, *, in_kernel, approx_recip=False):
    """Elementwise activation math. `in_kernel` selects Pallas-only prims."""
    if fname == "fr":
        return jnp.maximum(x, 0.0)
    if fname == "fr6":
        return jnp.clip(x, 0.0, 6.0)
    if fname == "fs":
        # x + sigmoid(x); sigmoid written as a single EUP tanh so the
        # transcendental slot never becomes the binding unit at v7x bandwidth.
        return x + (0.5 * jnp.tanh(0.5 * x) + 0.5)
    if fname == "fe":
        return -1.0 + 2.0 * x + jnp.exp(-x)
    if fname == "fg":
        # NOTE: inf/NaN at x == 1.0 -- matches the PyTorch semantics.
        if in_kernel:
            # approx (~2^-12) reciprocal is plenty for bf16 outputs and runs
            # entirely in the EUP slot; keep exact for f32 outputs.
            return pl.reciprocal(1.0 - x, approx=approx_recip) - 1.0
        return 1.0 / (1.0 - x) - 1.0
    if fname == "fx":
        return x
    if fname == "f3":
        return x - x * x + x * x * x
    raise ValueError(f"unknown fname: {fname}")


def _poly_active_kernel(x_ref, o_ref, *, fname, approx_recip):
    x = x_ref[...]
    if fname in _NEEDS_F32:
        x = x.astype(jnp.float32)
    o_ref[...] = _activation(
        fname, x, in_kernel=True, approx_recip=approx_recip
    ).astype(o_ref.dtype)


def _poly_active_impl(x, fname):
    orig_shape = x.shape
    orig_dtype = x.dtype
    n = x.size
    itemsize = jnp.dtype(orig_dtype).itemsize
    approx_recip = orig_dtype == jnp.bfloat16

    def small_path(v):
        vc = v.astype(jnp.float32) if fname in _NEEDS_F32 else v
        return _activation(fname, vc, in_kernel=False).astype(orig_dtype)

    flat = jnp.reshape(x, (n,))
    n_bulk = (n // _LANE) * _LANE
    tail = n - n_bulk

    if n_bulk == 0:
        # Fewer than 128 elements: not worth a kernel launch.
        return small_path(flat).reshape(orig_shape)

    rows = n_bulk // _LANE
    x2d = (flat[:n_bulk] if tail else flat).reshape(rows, _LANE)

    # --- block sizing -------------------------------------------------------
    target_block_bytes, split_two_cores, vmem_limit = _device_params()
    sub = max(_SUBLANE, 32 // itemsize)  # sublane multiple: 8 f32, 16 bf16, 32 i8
    target_rows = max(sub, (target_block_bytes // (_LANE * itemsize)) // sub * sub)
    if rows <= target_rows:
        block_rows = rows  # single full-array block (always layout-legal)
    else:
        block_rows = target_rows
    if split_two_cores:
        # v7x megacore: keep >=2 "parallel" grid steps so both TCs stream.
        block_rows = min(block_rows, max(sub, _round_up(pl.cdiv(rows, 2), sub)))
    grid = (pl.cdiv(rows, block_rows),)  # ragged last block handled by masking

    cost = pl.CostEstimate(
        flops=_FLOPS_PER_ELEM[fname] * n_bulk,
        transcendentals=_TRANS_PER_ELEM.get(fname, 0) * n_bulk,
        bytes_accessed=2 * n_bulk * itemsize,
    )
    compiler_kwargs = dict(dimension_semantics=("parallel",))
    if vmem_limit is not None:
        compiler_kwargs["vmem_limit_bytes"] = vmem_limit

    out2d = pl.pallas_call(
        functools.partial(_poly_active_kernel, fname=fname,
                          approx_recip=approx_recip),
        out_shape=jax.ShapeDtypeStruct((rows, _LANE), orig_dtype),
        grid_spec=pltpu.PrefetchScalarGridSpec(
            num_scalar_prefetch=0,
            grid=grid,
            in_specs=[pl.BlockSpec((block_rows, _LANE), lambda i: (i, 0))],
            out_specs=pl.BlockSpec((block_rows, _LANE), lambda i: (i, 0)),
        ),
        compiler_params=pltpu.CompilerParams(**compiler_kwargs),
        cost_estimate=cost,
    )(x2d)

    out_flat = out2d.reshape(n_bulk)
    if tail:
        # TODO(synk): the <=127-element tail is computed with plain jnp and
        # concatenated; a scalar-prefetched masked last block would also avoid
        # the final O(n) concatenate on ragged shapes.
        out_flat = jnp.concatenate([out_flat, small_path(flat[n_bulk:])])
    return out_flat.reshape(orig_shape)


_poly_active_jit = jax.jit(_poly_active_impl, static_argnames=("fname",))


def poly_active(x, fname="fx"):
    if fname not in _FNAMES:
        raise ValueError(f"unknown fname: {fname}")
    if fname == "fx" or x.size == 0:
        return x  # identity / empty: zero HBM traffic, no kernel launch
    return _poly_active_jit(x, fname=fname)


class PolyActive:
    """JAX/Pallas port of the PyTorch PolyActive module."""

    def __init__(self, fname="fx", a=0, b=0, c=0):
        assert fname in _FNAMES  # mirrors the assert in the PyTorch __init__
        self.fname = fname
        self.a = a  # stored but unused in forward (same as PyTorch)
        self.b = b
        self.c = c

    def __call__(self, x):
        return poly_active(x, fname=self.fname)

    def __repr__(self):
        return f"{self.__class__.__name__}({self.fname})"


def _reference(x, fname):
    # Mirrors the kernel's compute dtype choices so comparisons are tight.
    xc = x.astype(jnp.float32) if fname in _NEEDS_F32 else x
    return _activation(fname, xc, in_kernel=False).astype(x.dtype)


if __name__ == "__main__":
    key = jax.random.PRNGKey(0)
    ok = True

    def check(x, fname, atol, rtol):
        global ok
        y = jax.block_until_ready(PolyActive(fname=fname)(x))
        y_ref = _reference(x, fname)
        if y.shape != x.shape or y.dtype != x.dtype:
            ok = False
            print(f"shape/dtype mismatch for {fname} {x.shape} {x.dtype}")
        elif not jnp.allclose(y.astype(jnp.float32), y_ref.astype(jnp.float32),
                              atol=atol, rtol=rtol):
            ok = False
            err = float(jnp.max(jnp.abs(y.astype(jnp.float32)
                                        - y_ref.astype(jnp.float32))))
            print(f"value mismatch for {fname} {x.shape} {x.dtype}: max err {err}")

    # NCHW input, matching the PyTorch conv convention.
    x_main = jax.random.normal(key, (2, 4, 16, 16), dtype=jnp.float32) * 0.4
    # Ragged size (numel % 128 != 0): kernel bulk + jnp tail path.
    x_ragged = jax.random.normal(jax.random.PRNGKey(1), (3, 5, 7, 11),
                                 dtype=jnp.float32) * 0.4
    # Tiny (<128 elements): pure jnp fallback path.
    x_tiny = jax.random.normal(jax.random.PRNGKey(3), (2, 3, 4, 5),
                               dtype=jnp.float32) * 0.4

    for fname in _FNAMES:
        check(x_main, fname, atol=1e-5, rtol=1e-5)
        check(x_ragged, fname, atol=1e-5, rtol=1e-5)
        check(x_tiny, fname, atol=1e-5, rtol=1e-5)

    # bf16 smoke test (non-pole branches), exercising the packed-dtype path.
    x_bf16 = (jax.random.normal(jax.random.PRNGKey(2), (2, 4, 16, 16),
                                dtype=jnp.float32) * 0.4).astype(jnp.bfloat16)
    for fname in ("fr", "fs", "f3"):
        check(x_bf16, fname, atol=2e-2, rtol=2e-2)

    if ok:
        print("KERNEL_OK")
</pallas_src>

<mosaic_0001>
module attributes {stable_mosaic.version = 11 : i64} {
  func.func @_poly_active_kernel(%arg0: i32, %arg1: memref<16x128xf32, #tpu.memory_space<vmem>>, %arg2: memref<16x128xf32, #tpu.memory_space<vmem>>) attributes {dimension_semantics = [#tpu.dimension_semantics<parallel>], iteration_bounds = array<i64: 1>, scalar_prefetch = 0 : i64, scratch_operands = 0 : i64, tpu.core_type = #tpu.core_type<tc>, window_params = [{transform_indices = @transform_0, window_bounds = array<i64: 16, 128>}, {transform_indices = @transform_1, window_bounds = array<i64: 16, 128>}]} {
    %c0 = arith.constant 0 : index
    %c0_0 = arith.constant 0 : index
    %0 = vector.load %arg1[%c0, %c0_0] : memref<16x128xf32, #tpu.memory_space<vmem>>, vector<16x128xf32>
    %cst = arith.constant 0.000000e+00 : f32
    %1 = vector.broadcast %cst : f32 to vector<16x128xf32>
    %2 = arith.maximumf %0, %1 : vector<16x128xf32>
    %c0_1 = arith.constant 0 : index
    %c0_2 = arith.constant 0 : index
    %3 = vector.load %arg2[%c0_1, %c0_2] : memref<16x128xf32, #tpu.memory_space<vmem>>, vector<16x128xf32>
    tpu.vector_store %arg2[%c0_1, %c0_2], %2 {strides = array<i32>} : memref<16x128xf32, #tpu.memory_space<vmem>>, vector<16x128xf32>,
    return
  }
  func.func @transform_0(%arg0: i32) -> (i32, i32) {
    %c0_i32 = arith.constant 0 : i32
    %c0_i32_0 = arith.constant 0 : i32
    return %arg0, %c0_i32 : i32, i32
  }
  func.func @transform_1(%arg0: i32) -> (i32, i32) {
    %c0_i32 = arith.constant 0 : i32
    %c0_i32_0 = arith.constant 0 : i32
    return %arg0, %c0_i32 : i32, i32
  }
}

</mosaic_0001>

<llo_original>
// kernel: _poly_active_impl.1
$region0: #{_poly_active_impl.1}
  #allocation0 [shape = 'u32[]', space=smem, size = 0x4, offset = 0x4, fixed_abs, tag = 'smem constant byte address 0x4 - core index']
  #allocation1 [shape = 'u32[72,128]{1,0:T(1,128)}', space=vmem, size = 0x9000, scoped, tag = 'internal scratch']
  %s0 = inlined_call_operand.vmem [shape: f32[16,128], index: 0, kind: input, shape index: {}]
  %s1 = inlined_call_operand.vmem [shape: f32[16,128], index: 1, kind: output, shape index: {}]
  %s2 = sld [smem:[#allocation0]]
  $region14: #{_poly_active_impl.1} parent=0
    _
  %s4 = ssub.s32 1, %s2
  %s5 = scalar_select 0, %s4, %s2
  // Predicated region
  $region2: #{_poly_active_impl.1} parent=0 // pred_check
    _
  $region3: #{_poly_active_impl.1} parent=0 // pred_check_branch
    %7 = sbr.rel (0) target = $region5
  $region4: #{_poly_active_impl.1} parent=0 // pred_region
    _
  $region5: #{_poly_active_impl.1} parent=0 // pred_fallthru
    _
  %v8 = vld [vmem:[%s0] sm:$0xff]
  %v9 = vld [vmem:[%s0 + $0x8] sm:$0xff]
  %v10 = vmax.f32 %v8, 0.0
  %v11 = vmax.f32 %v9, 0.0
  %12 = vst [vmem:[%s1] sm:$0xff] %v10
  %13 = vst [vmem:[%s1 + $0x8] sm:$0xff] %v11
  // Predicated region
  $region6: #{_poly_active_impl.1} parent=0 // pred_check
    _
  $region7: #{_poly_active_impl.1} parent=0 // pred_check_branch
    %15 = sbr.rel (0) target = $region9
  $region8: #{_poly_active_impl.1} parent=0 // pred_region
    _
  $region9: #{_poly_active_impl.1} parent=0 // pred_fallthru
    _
  // Predicated region
  $region10: #{_poly_active_impl.1} parent=0 // pred_check
    _
  $region11: #{_poly_active_impl.1} parent=0 // pred_check_branch
    %17 = sbr.rel (0) target = $region13
  $region12: #{_poly_active_impl.1} parent=0 // pred_region
    _
  $region13: #{_poly_active_impl.1} parent=0 // pred_fallthru
    _

</llo_original>
